<compile_context>
chip_gen: v7x
topology: tpu7x:2x2x1
jax: 0.10.0
libtpu: 0.0.40
codegen_flags: <defaults>
</compile_context>

<pallas_src>
import math

import jax
import jax.numpy as jnp
import numpy as np
from jax.experimental import pallas as pl
from jax.experimental.pallas import tpu as pltpu


def fasttext_kernel(word_ref, char_ref, lens_ref, wc_ref, bflat_ref,
                    w_word_ref, w_char_ref, lin_b_ref, out_ref):
    TB, S, E = word_ref.shape            # word block: (tile_b, S, E), bf16
    G = w_char_ref.shape[0]              # lane-padded filter group width (128)
    LG = wc_ref.shape[1]                 # L * G
    L = LG // G

    # --- char CNN: single MXU matmul (bf16 in, f32 accumulate) ---
    conv = jnp.dot(char_ref[...], wc_ref[...],
                   preferred_element_type=jnp.float32)             # (TB*S, L*G)
    conv = jnp.maximum(conv + bflat_ref[...], 0.0)                  # +bias, ReLU
    # max over the L conv positions: 128-lane-aligned, whole-vreg VPU maxes
    feat = conv[:, 0:G]
    for l in range(1, L):
        feat = jnp.maximum(feat, conv[:, l * G:(l + 1) * G])        # (TB*S, G)
    char_feat = feat.reshape(TB, S, G)                              # (TB, S, G)

    # --- sequence mask built in-kernel from lengths ---
    lens = lens_ref[...]                                            # (TB,1,1) int32
    iota_s = jax.lax.broadcasted_iota(jnp.int32, (TB, S, 1), 1)
    mask = iota_s < lens                                            # (TB, S, 1) bool

    # --- masked mean over S (torch.mean divides by S, incl. padded slots) ---
    inv_s = jnp.float32(1.0 / S)
    # mask-multiply in bf16 (exact: mask is 0/1); accumulate in f32.
    w_masked = word_ref[...] * mask.astype(word_ref.dtype)          # (TB, S, E) bf16
    mean_word = jnp.sum(w_masked.astype(jnp.float32), axis=1) * inv_s   # (TB, E)
    mean_char = jnp.sum(char_feat * mask.astype(jnp.float32), axis=1) * inv_s  # (TB, G)

    # --- linear head: cat([word, char]) @ W.T + b, as two small matmuls
    # (in-kernel lane-concat of the two means would cost a relayout; padded
    #  char lanes hit zero rows of w_char_ref, so this is exact).
    out = (jnp.dot(mean_word, w_word_ref[...], preferred_element_type=jnp.float32)
           + jnp.dot(mean_char, w_char_ref[...], preferred_element_type=jnp.float32)
           + lin_b_ref[...])                                        # (TB, C)
    out_ref[...] = out.reshape(TB, 1, -1).astype(out_ref.dtype)


def init_params(key, vocab_size, embedding_size, char_vocab_size,
                char_embedding_size, num_filter, ngram, num_classes):
    k1, k2, k3, k4, k5 = jax.random.split(key, 5)
    # nn.Embedding weights, init.uniform_(-0.1, 0.1); stored bf16 so the XLA
    # gathers move half the HBM bytes.
    embedding = jax.random.uniform(k1, (vocab_size, embedding_size),
                                   jnp.float32, -0.1, 0.1).astype(jnp.bfloat16)
    char_embedding = jax.random.uniform(k2, (char_vocab_size, char_embedding_size),
                                        jnp.float32, -0.1, 0.1)
    # zero row 0 = padding_idx semantics; replaces the (char_id != 0) mask that
    # TokenCharactersEncoder applies before the CNN.
    char_embedding = char_embedding.at[0].set(0.0).astype(jnp.bfloat16)
    # Conv1d(CE, F, ngram) deterministic uniform init
    fan_in = char_embedding_size * ngram
    bound = float(1.0 / np.sqrt(fan_in))
    conv_w_torch = jax.random.uniform(k3, (num_filter, char_embedding_size, ngram),
                                      jnp.float32, -bound, bound)
    conv_b = jax.random.uniform(k4, (1, num_filter), jnp.float32, -bound, bound)
    conv_w = jnp.transpose(conv_w_torch, (2, 1, 0))          # (K, CE, F)
    # Linear(E + F, C): xavier_normal_ weight, zero bias
    in_dim = embedding_size + num_filter
    std = float(np.sqrt(2.0 / (in_dim + num_classes)))
    lin_w_torch = std * jax.random.normal(k5, (num_classes, in_dim), jnp.float32)
    lin_b = jnp.zeros((1, num_classes), jnp.float32)
    return dict(
        embedding=embedding,
        char_embedding=char_embedding,
        conv_w=conv_w,
        conv_b=conv_b,
        w_word=jnp.transpose(lin_w_torch[:, :embedding_size]),   # (E, C)
        w_char=jnp.transpose(lin_w_torch[:, embedding_size:]),   # (F, C)
        lin_b=lin_b,
    )


def build_kernel_constants(params, max_word_len):
    """Host-side, one-time construction of the kernel's weight constants.

    Build once and reuse across forward calls (do NOT call under jit: it pulls
    param values to host to avoid per-call dynamic-update-slice chains).
    """
    conv_w = np.asarray(params["conv_w"], np.float32)        # (K, CE, F)
    conv_b = np.asarray(params["conv_b"], np.float32).reshape(-1)   # (F,)
    w_char = np.asarray(params["w_char"], np.float32)        # (F, C)
    K, CE, F = conv_w.shape
    W = max_word_len
    L = W - K + 1                                            # conv out length
    G = max(128, ((F + 127) // 128) * 128)                   # lane-aligned group

    # Block-structured conv weight: one matmul (W*CE) x (L*G);
    # wc[(w*CE + c), (l*G + f)] = conv_w[w-l, c, f], zero elsewhere.
    wc = np.zeros((W * CE, L * G), np.float32)
    for l in range(L):
        for k in range(K):
            w = l + k
            wc[w * CE:(w + 1) * CE, l * G:l * G + F] = conv_w[k]

    grp_bias = np.zeros((G,), np.float32)
    grp_bias[:F] = conv_b
    bias_flat = np.tile(grp_bias, L)[None, :]                # (1, L*G)

    w_char_pad = np.zeros((G, w_char.shape[1]), np.float32)  # (G, C)
    w_char_pad[:F] = w_char

    return dict(
        wc=jnp.asarray(wc, jnp.bfloat16),
        bias_flat=jnp.asarray(bias_flat, jnp.float32),
        w_char_pad=jnp.asarray(w_char_pad, jnp.float32),
        group=G,
        conv_len=L,
    )


def _pick_block_b(B, S, target_rows=4096):
    """Batch-tile so tb*S ~= target_rows token rows per grid step.

    Constraints: tb*S a multiple of 8 (layout requirement when grid > 1; 16
    preferred for bf16 sublane packing) and >= 2 grid steps when B >= 2 (v7x
    megacore). target_rows=4096 fits a ~48 MiB VMEM budget on every chip
    generation; raise to 8192-16384 (and vmem_limit_bytes) on v5e/v6e only.
    """
    align16 = 16 // math.gcd(S, 16)
    align8 = 8 // math.gcd(S, 8)
    cap = max(1, min(target_rows // max(S, 1), B))
    if B >= 2:
        cap = min(cap, (B + 1) // 2)          # keep >= 2 grid steps
    tb = (cap // align16) * align16
    if tb == 0:
        tb = (cap // align8) * align8
    if tb == 0:
        tb = align8                            # minimal layout-legal tile
    return tb


def fasttext_forward(params, input_ids, input_lens, char_input, char_input_lens,
                     block_b=None, consts=None):
    # char_input_lens is accepted for signature parity; in the torch module the
    # mask built from it is dead code (never consumed downstream).
    del char_input_lens
    B, S = input_ids.shape
    _, _, W = char_input.shape
    E = params["embedding"].shape[1]
    CE = params["char_embedding"].shape[1]
    C = params["lin_b"].shape[-1]

    if consts is None:
        consts = build_kernel_constants(params, W)   # hoist if calling under jit
    G = consts["group"]
    L = consts["conv_len"]

    if block_b is None:
        block_b = _pick_block_b(B, S)
    tb = block_b

    # --- pad batch up to a multiple of the tile (padded rows: lens=0, ids=0) ---
    Bp = ((B + tb - 1) // tb) * tb
    input_lens = input_lens.reshape(-1).astype(jnp.int32)
    if Bp != B:
        pad = Bp - B
        input_ids = jnp.pad(input_ids, ((0, pad), (0, 0)))
        input_lens = jnp.pad(input_lens, ((0, pad),))
        char_input = jnp.pad(char_input, ((0, pad), (0, 0), (0, 0)))

    # --- XLA glue: bf16 gathers (tables already bf16, char row 0 zeroed) ---
    word_emb = jnp.take(params["embedding"], input_ids, axis=0)        # (Bp,S,E) bf16
    char_emb = jnp.take(params["char_embedding"], char_input, axis=0)  # (Bp,S,W,CE) bf16
    char_flat = char_emb.reshape(Bp * S, W * CE)                       # lane-dense bf16
    lens3 = input_lens.reshape(Bp, 1, 1)                               # (Bp,1,1) int32

    grid = (Bp // tb,)
    out = pl.pallas_call(
        fasttext_kernel,
        out_shape=jax.ShapeDtypeStruct((Bp, 1, C), jnp.float32),
        grid=grid,
        in_specs=[
            pl.BlockSpec((tb, S, E), lambda i: (i, 0, 0)),       # word_emb (bf16)
            pl.BlockSpec((tb * S, W * CE), lambda i: (i, 0)),    # char_flat (bf16)
            pl.BlockSpec((tb, 1, 1), lambda i: (i, 0, 0)),       # input_lens
            pl.BlockSpec((W * CE, L * G), lambda i: (0, 0)),     # conv block weight
            pl.BlockSpec((1, L * G), lambda i: (0, 0)),          # conv bias (padded)
            pl.BlockSpec((E, C), lambda i: (0, 0)),              # w_word
            pl.BlockSpec((G, C), lambda i: (0, 0)),              # w_char (padded)
            pl.BlockSpec((1, C), lambda i: (0, 0)),              # lin_b
        ],
        out_specs=pl.BlockSpec((tb, 1, C), lambda i: (i, 0, 0)),
        compiler_params=pltpu.CompilerParams(
            dimension_semantics=("parallel",),
            # 48 MiB: covers the 4096-token-row tile (incl. the lane-padded f32
            # conv intermediate) with headroom; still < v7x's 64 MiB physical.
            vmem_limit_bytes=48 * 1024 * 1024),
    )(word_emb, char_flat, lens3, consts["wc"], consts["bias_flat"],
      params["w_word"], consts["w_char_pad"], params["lin_b"])
    return out.reshape(Bp, C)[:B]


def reference_forward(params, input_ids, input_lens, char_input):
    """Pure-JAX f32 reference mirroring the PyTorch forward."""
    B, S = input_ids.shape
    _, _, W = char_input.shape
    word_emb = jnp.take(params["embedding"], input_ids, axis=0).astype(jnp.float32)
    char_emb = jnp.take(params["char_embedding"], char_input, axis=0).astype(jnp.float32)
    char_mask = (char_input != 0).astype(jnp.float32)
    char_x = (char_emb * char_mask[..., None]).reshape(B * S, W, -1)
    K = params["conv_w"].shape[0]
    L = W - K + 1
    acc = jnp.zeros((B * S, L, params["conv_w"].shape[2]), jnp.float32)
    for k in range(K):
        acc = acc + jnp.einsum("blc,cf->blf", char_x[:, k:k + L, :],
                               params["conv_w"][k])
    acc = acc + params["conv_b"][None, :, :]
    char_feat = jnp.max(jnp.maximum(acc, 0.0), axis=1).reshape(B, S, -1)
    seq_mask = (jnp.arange(S)[None, :]
                < input_lens.reshape(-1)[:, None]).astype(jnp.float32)
    cat = jnp.concatenate([word_emb, char_feat], axis=-1) * seq_mask[..., None]
    mean = jnp.mean(cat, axis=1)
    W_full = jnp.concatenate([params["w_word"], params["w_char"]], axis=0)
    return mean @ W_full + params["lin_b"]


def _make_inputs(key, B, S, W, vocab_size, char_vocab_size):
    k_in, k_len, k_ch, k_chlen = jax.random.split(key, 4)
    input_ids = jax.random.randint(k_in, (B, S), 1, vocab_size, dtype=jnp.int32)
    input_lens = jax.random.randint(k_len, (B,), 1, S + 1, dtype=jnp.int32)
    char_ids = jax.random.randint(k_ch, (B, S, W), 1, char_vocab_size, dtype=jnp.int32)
    char_input_lens = jax.random.randint(k_chlen, (B, S), 1, W + 1, dtype=jnp.int32)
    # zero-pad chars past each word's length so padding_idx-0 semantics apply
    char_ids = jnp.where(jnp.arange(W)[None, None, :] < char_input_lens[..., None],
                         char_ids, 0)
    return input_ids, input_lens, char_ids, char_input_lens


if __name__ == "__main__":
    # Small synthetic shapes consistent with the module.
    vocab_size, embedding_size = 100, 32
    char_vocab_size, char_embedding_size = 50, 16
    num_filter, ngram, num_classes = 32, 3, 8
    S, W = 8, 8

    key = jax.random.PRNGKey(0)
    kp, k_a, k_b = jax.random.split(key, 3)
    params = init_params(kp, vocab_size, embedding_size, char_vocab_size,
                         char_embedding_size, num_filter, ngram, num_classes)
    consts = build_kernel_constants(params, W)     # built once, reused

    # Case 1: B=2 -> tb=1, grid=2 (exercises the pipelined multi-step grid).
    ids, lens, cids, clens = _make_inputs(k_a, 2, S, W, vocab_size, char_vocab_size)
    out = fasttext_forward(params, ids, lens, cids, clens, consts=consts)
    out = jax.block_until_ready(out)
    ref = reference_forward(params, ids, lens, cids)
    np.testing.assert_allclose(np.asarray(out), np.asarray(ref), rtol=2e-2, atol=2e-2)

    # Case 2: B=5 (not a multiple of the tile) -> tb=2, batch padded to 6,
    # grid=3 (exercises the batch-padding path).
    ids, lens, cids, clens = _make_inputs(k_b, 5, S, W, vocab_size, char_vocab_size)
    out = fasttext_forward(params, ids, lens, cids, clens, consts=consts)
    out = jax.block_until_ready(out)
    ref = reference_forward(params, ids, lens, cids)
    np.testing.assert_allclose(np.asarray(out), np.asarray(ref), rtol=2e-2, atol=2e-2)

    print("KERNEL_OK")
</pallas_src>

<mosaic_0001>
module attributes {stable_mosaic.version = 11 : i64} {
  func.func @fasttext_kernel(%arg0: i32, %arg1: memref<1x8x32xbf16, #tpu.memory_space<vmem>>, %arg2: memref<8x128xbf16, #tpu.memory_space<vmem>>, %arg3: memref<1x1x1xi32, #tpu.memory_space<vmem>>, %arg4: memref<128x768xbf16, #tpu.memory_space<vmem>>, %arg5: memref<1x768xf32, #tpu.memory_space<vmem>>, %arg6: memref<32x8xf32, #tpu.memory_space<vmem>>, %arg7: memref<128x8xf32, #tpu.memory_space<vmem>>, %arg8: memref<1x8xf32, #tpu.memory_space<vmem>>, %arg9: memref<1x1x8xf32, #tpu.memory_space<vmem>>) attributes {dimension_semantics = [#tpu.dimension_semantics<parallel>], iteration_bounds = array<i64: 2>, scalar_prefetch = 0 : i64, scratch_operands = 0 : i64, tpu.core_type = #tpu.core_type<tc>, window_params = [{transform_indices = @transform_0, window_bounds = array<i64: 1, 8, 32>}, {transform_indices = @transform_1, window_bounds = array<i64: 8, 128>}, {transform_indices = @transform_2, window_bounds = array<i64: 1, 1, 1>}, {pipeline_mode = #tpu.pipeline_mode<synchronous>, transform_indices = @transform_3, window_bounds = array<i64: 128, 768>}, {pipeline_mode = #tpu.pipeline_mode<synchronous>, transform_indices = @transform_4, window_bounds = array<i64: 1, 768>}, {pipeline_mode = #tpu.pipeline_mode<synchronous>, transform_indices = @transform_5, window_bounds = array<i64: 32, 8>}, {pipeline_mode = #tpu.pipeline_mode<synchronous>, transform_indices = @transform_6, window_bounds = array<i64: 128, 8>}, {pipeline_mode = #tpu.pipeline_mode<synchronous>, transform_indices = @transform_7, window_bounds = array<i64: 1, 8>}, {transform_indices = @transform_8, window_bounds = array<i64: 1, 1, 8>}]} {
    %c0 = arith.constant 0 : index
    %c0_0 = arith.constant 0 : index
    %0 = vector.load %arg2[%c0, %c0_0] : memref<8x128xbf16, #tpu.memory_space<vmem>>, vector<8x128xbf16>
    %c0_1 = arith.constant 0 : index
    %c0_2 = arith.constant 0 : index
    %1 = vector.load %arg4[%c0_1, %c0_2] : memref<128x768xbf16, #tpu.memory_space<vmem>>, vector<128x768xbf16>
    %cst = arith.constant dense<0.000000e+00> : vector<8x768xf32>
    %2 = tpu.matmul %0, %1, %cst {dimension_numbers = #tpu.dot_dimension_numbers<[1], [0], [0], [1], [0, 0, 1, 1], [], []>} : vector<8x128xbf16>, vector<128x768xbf16>, vector<8x768xf32> -> vector<8x768xf32>
    %c0_3 = arith.constant 0 : index
    %c0_4 = arith.constant 0 : index
    %3 = vector.load %arg5[%c0_3, %c0_4] : memref<1x768xf32, #tpu.memory_space<vmem>>, vector<1x768xf32>
    %4 = vector.broadcast %3 : vector<1x768xf32> to vector<8x768xf32>
    %5 = arith.addf %2, %4 : vector<8x768xf32>
    %cst_5 = arith.constant 0.000000e+00 : f32
    %6 = vector.broadcast %cst_5 : f32 to vector<8x768xf32>
    %7 = arith.maximumf %5, %6 : vector<8x768xf32>
    %8 = vector.extract_strided_slice %7 {offsets = [0, 0], sizes = [8, 128], strides = [1, 1]} : vector<8x768xf32> to vector<8x128xf32>
    %9 = vector.extract_strided_slice %7 {offsets = [0, 128], sizes = [8, 128], strides = [1, 1]} : vector<8x768xf32> to vector<8x128xf32>
    %10 = arith.maximumf %8, %9 : vector<8x128xf32>
    %11 = vector.extract_strided_slice %7 {offsets = [0, 256], sizes = [8, 128], strides = [1, 1]} : vector<8x768xf32> to vector<8x128xf32>
    %12 = arith.maximumf %10, %11 : vector<8x128xf32>
    %13 = vector.extract_strided_slice %7 {offsets = [0, 384], sizes = [8, 128], strides = [1, 1]} : vector<8x768xf32> to vector<8x128xf32>
    %14 = arith.maximumf %12, %13 : vector<8x128xf32>
    %15 = vector.extract_strided_slice %7 {offsets = [0, 512], sizes = [8, 128], strides = [1, 1]} : vector<8x768xf32> to vector<8x128xf32>
    %16 = arith.maximumf %14, %15 : vector<8x128xf32>
    %17 = vector.extract_strided_slice %7 {offsets = [0, 640], sizes = [8, 128], strides = [1, 1]} : vector<8x768xf32> to vector<8x128xf32>
    %18 = arith.maximumf %16, %17 : vector<8x128xf32>
    %19 = vector.shape_cast %18 : vector<8x128xf32> to vector<1x8x128xf32>
    %c0_6 = arith.constant 0 : index
    %c0_7 = arith.constant 0 : index
    %c0_8 = arith.constant 0 : index
    %20 = vector.load %arg3[%c0_6, %c0_7, %c0_8] : memref<1x1x1xi32, #tpu.memory_space<vmem>>, vector<1x1x1xi32>
    %21 = tpu.iota {dimensions = array<i32: 1>} : vector<1x8x1xi32>
    %22 = vector.broadcast %20 : vector<1x1x1xi32> to vector<1x8x1xi32>
    %23 = arith.cmpi slt, %21, %22 : vector<1x8x1xi32>
    %c0_9 = arith.constant 0 : index
    %c0_10 = arith.constant 0 : index
    %c0_11 = arith.constant 0 : index
    %24 = vector.load %arg1[%c0_9, %c0_10, %c0_11] : memref<1x8x32xbf16, #tpu.memory_space<vmem>>, vector<1x8x32xbf16>
    %25 = arith.extui %23 : vector<1x8x1xi1> to vector<1x8x1xi32>
    %26 = arith.sitofp %25 : vector<1x8x1xi32> to vector<1x8x1xf32>
    %27 = arith.truncf %26 : vector<1x8x1xf32> to vector<1x8x1xbf16>
    %28 = vector.broadcast %27 : vector<1x8x1xbf16> to vector<1x8x32xbf16>
    %29 = arith.mulf %24, %28 : vector<1x8x32xbf16>
    %30 = arith.extf %29 : vector<1x8x32xbf16> to vector<1x8x32xf32>
    %cst_12 = arith.constant dense<0.000000e+00> : vector<1x32xf32>
    %31 = vector.multi_reduction <add>, %30, %cst_12 [1] : vector<1x8x32xf32> to vector<1x32xf32>
    %cst_13 = arith.constant 1.250000e-01 : f32
    %32 = vector.broadcast %cst_13 : f32 to vector<1x32xf32>
    %33 = arith.mulf %31, %32 : vector<1x32xf32>
    %34 = arith.extui %23 : vector<1x8x1xi1> to vector<1x8x1xi32>
    %35 = arith.sitofp %34 : vector<1x8x1xi32> to vector<1x8x1xf32>
    %36 = vector.broadcast %35 : vector<1x8x1xf32> to vector<1x8x128xf32>
    %37 = arith.mulf %19, %36 : vector<1x8x128xf32>
    %cst_14 = arith.constant dense<0.000000e+00> : vector<1x128xf32>
    %38 = vector.multi_reduction <add>, %37, %cst_14 [1] : vector<1x8x128xf32> to vector<1x128xf32>
    %cst_15 = arith.constant 1.250000e-01 : f32
    %39 = vector.broadcast %cst_15 : f32 to vector<1x128xf32>
    %40 = arith.mulf %38, %39 : vector<1x128xf32>
    %c0_16 = arith.constant 0 : index
    %c0_17 = arith.constant 0 : index
    %41 = vector.load %arg6[%c0_16, %c0_17] : memref<32x8xf32, #tpu.memory_space<vmem>>, vector<32x8xf32>
    %cst_18 = arith.constant dense<0.000000e+00> : vector<1x8xf32>
    %42 = tpu.matmul %33, %41, %cst_18 {dimension_numbers = #tpu.dot_dimension_numbers<[1], [0], [0], [1], [0, 0, 1, 1], [], []>} : vector<1x32xf32>, vector<32x8xf32>, vector<1x8xf32> -> vector<1x8xf32>
    %c0_19 = arith.constant 0 : index
    %c0_20 = arith.constant 0 : index
    %43 = vector.load %arg7[%c0_19, %c0_20] : memref<128x8xf32, #tpu.memory_space<vmem>>, vector<128x8xf32>
    %cst_21 = arith.constant dense<0.000000e+00> : vector<1x8xf32>
    %44 = tpu.matmul %40, %43, %cst_21 {dimension_numbers = #tpu.dot_dimension_numbers<[1], [0], [0], [1], [0, 0, 1, 1], [], []>} : vector<1x128xf32>, vector<128x8xf32>, vector<1x8xf32> -> vector<1x8xf32>
    %45 = arith.addf %42, %44 : vector<1x8xf32>
    %c0_22 = arith.constant 0 : index
    %c0_23 = arith.constant 0 : index
    %46 = vector.load %arg8[%c0_22, %c0_23] : memref<1x8xf32, #tpu.memory_space<vmem>>, vector<1x8xf32>
    %47 = arith.addf %45, %46 : vector<1x8xf32>
    %48 = vector.shape_cast %47 : vector<1x8xf32> to vector<1x1x8xf32>
    %c0_24 = arith.constant 0 : index
    %c0_25 = arith.constant 0 : index
    %c0_26 = arith.constant 0 : index
    %49 = vector.load %arg9[%c0_24, %c0_25, %c0_26] : memref<1x1x8xf32, #tpu.memory_space<vmem>>, vector<1x1x8xf32>
    tpu.vector_store %arg9[%c0_24, %c0_25, %c0_26], %48 {strides = array<i32>} : memref<1x1x8xf32, #tpu.memory_space<vmem>>, vector<1x1x8xf32>,
    return
  }
  func.func @transform_0(%arg0: i32) -> (i32, i32, i32) {
    %c0_i32 = arith.constant 0 : i32
    %c0_i32_0 = arith.constant 0 : i32
    %c0_i32_1 = arith.constant 0 : i32
    return %arg0, %c0_i32, %c0_i32_0 : i32, i32, i32
  }
  func.func @transform_1(%arg0: i32) -> (i32, i32) {
    %c0_i32 = arith.constant 0 : i32
    %c0_i32_0 = arith.constant 0 : i32
    return %arg0, %c0_i32 : i32, i32
  }
  func.func @transform_2(%arg0: i32) -> (i32, i32, i32) {
    %c0_i32 = arith.constant 0 : i32
    %c0_i32_0 = arith.constant 0 : i32
    %c0_i32_1 = arith.constant 0 : i32
    return %arg0, %c0_i32, %c0_i32_0 : i32, i32, i32
  }
  func.func @transform_3(%arg0: i32) -> (i32, i32) {
    %c0_i32 = arith.constant 0 : i32
    %c0_i32_0 = arith.constant 0 : i32
    %c0_i32_1 = arith.constant 0 : i32
    return %c0_i32, %c0_i32_0 : i32, i32
  }
  func.func @transform_4(%arg0: i32) -> (i32, i32) {
    %c0_i32 = arith.constant 0 : i32
    %c0_i32_0 = arith.constant 0 : i32
    %c0_i32_1 = arith.constant 0 : i32
    return %c0_i32, %c0_i32_0 : i32, i32
  }
  func.func @transform_5(%arg0: i32) -> (i32, i32) {
    %c0_i32 = arith.constant 0 : i32
    %c0_i32_0 = arith.constant 0 : i32
    %c0_i32_1 = arith.constant 0 : i32
    return %c0_i32, %c0_i32_0 : i32, i32
  }
  func.func @transform_6(%arg0: i32) -> (i32, i32) {
    %c0_i32 = arith.constant 0 : i32
    %c0_i32_0 = arith.constant 0 : i32
    %c0_i32_1 = arith.constant 0 : i32
    return %c0_i32, %c0_i32_0 : i32, i32
  }
  func.func @transform_7(%arg0: i32) -> (i32, i32) {
    %c0_i32 = arith.constant 0 : i32
    %c0_i32_0 = arith.constant 0 : i32
    %c0_i32_1 = arith.constant 0 : i32
    return %c0_i32, %c0_i32_0 : i32, i32
  }
  func.func @transform_8(%arg0: i32) -> (i32, i32, i32) {
    %c0_i32 = arith.constant 0 : i32
    %c0_i32_0 = arith.constant 0 : i32
    %c0_i32_1 = arith.constant 0 : i32
    return %arg0, %c0_i32, %c0_i32_0 : i32, i32, i32
  }
}

</mosaic_0001>

<llo_original>
// kernel: tpu_custom_call.1
$region0: #{tpu_custom_call.1}
  #allocation0 [shape = 'u32[]', space=smem, size = 0x4, offset = 0x4, fixed_abs, tag = 'smem constant byte address 0x4 - core index']
  #allocation1 [shape = 'u32[144,128]{1,0:T(1,128)}', space=vmem, size = 0x12000, scoped, tag = 'internal scratch']
  %s0 = inlined_call_operand.vmem [shape: bf16[2,8,32], index: 0, kind: input, shape index: {}]
  %s1 = inlined_call_operand.vmem [shape: bf16[16,128], index: 1, kind: input, shape index: {}]
  %s2 = inlined_call_operand.vmem [shape: s32[2,1,1], index: 2, kind: input, shape index: {}]
  %s3 = inlined_call_operand.hbm [shape: bf16[128,768], index: 3, kind: input, shape index: {}]
  %s4 = inlined_call_operand.vmem [shape: f32[1,768], index: 4, kind: input, shape index: {}]
  %s5 = inlined_call_operand.vmem [shape: f32[32,8], index: 5, kind: input, shape index: {}]
  %s6 = inlined_call_operand.vmem [shape: f32[128,8], index: 6, kind: input, shape index: {}]
  %s7 = inlined_call_operand.vmem [shape: f32[1,8], index: 7, kind: input, shape index: {}]
  %s8 = inlined_call_operand.hbm [shape: f32[2,1,8], index: 8, kind: output, shape index: {}]
  %s9 = sld [smem:[#allocation0]]
  $region69: #{tpu_custom_call.1} parent=0
    _
  %s11 = ssub.s32 1, %s9
  %s12 = scalar_select 0, %s11, %s9
  $region1: #{tpu_custom_call.1} parent=0
    #allocation2 [shape = 'u8[196608]{0}', space=vmem, size = 0x30000, scoped, tag = 'input window, operand 3, single buffered']
    #allocation3 [shape = 's32[2]{0}', space=sflag, size = 0x8, scoped, tag = 'scoped memory for tpu_custom_call.1']
    #allocation4 [shape = 's32[2]{0}', space=sflag, size = 0x8, scoped, tag = 'scoped memory for tpu_custom_call.1']
    #allocation5 [shape = 'u8[1024]{0}', space=vmem, size = 0x400, scoped, tag = 'output window, operand 0']
    %13 = vsyncpa [#allocation3], 0
    %14 = vsyncpa [#allocation4], 0
    %s15 = scalar_lea.sflag [#allocation4], 1
    %16 = vsyncpa %s15, 0
    loop: start=0, step=1, limit=4
    $region2: #{tpu_custom_call.1} parent=1 // loop_pre_header
      _
    $region3: #{tpu_custom_call.1} parent=1 // loop_header
      %s18 = sphi 0, %s22
      %p19 = scmp.ge.s32.totalorder %s18, 4
      %s28 = sphi 0, %s30
      %s31 = sphi 0, %s28
      %s32 = sphi 0, %s31
      %s48 = sphi 0, %s32
      %s54 = sphi 0, %s56
      %s57 = sphi 0, %s54
      %s58 = sphi 0, %s57
      %s74 = sphi 0, %s58
      %s80 = sphi 0, %s82
      %s83 = sphi 0, %s80
      %s84 = sphi 0, %s83
      %s100 = sphi 0, %s84
      %s104 = sphi 0, %s104
      %s106 = sphi 0, %s104
      %s107 = sphi 0, %s106
      %s121 = sphi 0, %s107
      %s125 = sphi 0, %s125
      %s127 = sphi 0, %s125
      %s128 = sphi 0, %s127
      %s142 = sphi 0, %s128
      %s146 = sphi 0, %s146
      %s148 = sphi 0, %s146
      %s149 = sphi 0, %s148
      %s163 = sphi 0, %s149
      %s167 = sphi 0, %s167
      %s169 = sphi 0, %s167
      %s170 = sphi 0, %s169
      %s184 = sphi 0, %s170
      %s188 = sphi 0, %s188
      %s190 = sphi 0, %s188
      %s191 = sphi 0, %s190
      %s205 = sphi 0, %s191
      %s211 = sphi 0, %s213
      %s214 = sphi 0, %s211
      %s215 = sphi 0, %s214
      %s231 = sphi 0, %s215
    $region4: #{tpu_custom_call.1} parent=1 // loop_header_branch
      %21 = sbr.rel (%p19) target = $region8
    $region5: #{tpu_custom_call.1} parent=1 // loop_body
      %s23 = ssub.s32 %s18, 1
      %s24 = ssub.s32 %s18, 2
      %s25 = sadd.s32 %s18, 1
      %s26 = ssub.s32 %s18, %s25
      %p27 = scmp.eq.s32.totalorder %s26, 0
      %s29 = sadd.s32 %s28, 1
      %s30 = scalar_select %p27, %s28, %s29
      %p33 = pneg %p27
      %p34 = scmp.eq.s32.totalorder %s18, 1
      %p35 = por %p33, %p34
      %p36 = scmp.ne.s32.totalorder %s28, %s31
      %p37 = scmp.eq.s32.totalorder %s18, 0
      %p38 = por %p36, %p37
      %p39 = scmp.ne.s32.totalorder %s28, %s31
      %p40 = scmp.eq.s32.totalorder %s23, 1
      %p41 = por %p39, %p40
      %p42 = scmp.ne.s32.totalorder %s31, %s32
      %p43 = scmp.eq.s32.totalorder %s23, 0
      %p44 = por %p42, %p43
      %p45 = scmp.ne.s32.totalorder %s31, %s32
      %p46 = scmp.eq.s32.totalorder %s24, 1
      %p47 = por %p45, %p46
      %p49 = scmp.ne.s32.totalorder %s32, %s48
      %p50 = scmp.eq.s32.totalorder %s24, 0
      %p51 = por %p49, %p50
      %s52 = ssub.s32 %s18, %s25
      %p53 = scmp.eq.s32.totalorder %s52, 0
      %s55 = sadd.s32 %s54, 1
      %s56 = scalar_select %p53, %s54, %s55
      %p59 = pneg %p53
      %p60 = scmp.eq.s32.totalorder %s18, 1
      %p61 = por %p59, %p60
      %p62 = scmp.ne.s32.totalorder %s54, %s57
      %p63 = scmp.eq.s32.totalorder %s18, 0
      %p64 = por %p62, %p63
      %p65 = scmp.ne.s32.totalorder %s54, %s57
      %p66 = scmp.eq.s32.totalorder %s23, 1
      %p67 = por %p65, %p66
      %p68 = scmp.ne.s32.totalorder %s57, %s58
      %p69 = scmp.eq.s32.totalorder %s23, 0
      %p70 = por %p68, %p69
      %p71 = scmp.ne.s32.totalorder %s57, %s58
      %p72 = scmp.eq.s32.totalorder %s24, 1
      %p73 = por %p71, %p72
      %p75 = scmp.ne.s32.totalorder %s58, %s74
      %p76 = scmp.eq.s32.totalorder %s24, 0
      %p77 = por %p75, %p76
      %s78 = ssub.s32 %s18, %s25
      %p79 = scmp.eq.s32.totalorder %s78, 0
      %s81 = sadd.s32 %s80, 1
      %s82 = scalar_select %p79, %s80, %s81
      %p85 = pneg %p79
      %p86 = scmp.eq.s32.totalorder %s18, 1
      %p87 = por %p85, %p86
      %p88 = scmp.ne.s32.totalorder %s80, %s83
      %p89 = scmp.eq.s32.totalorder %s18, 0
      %p90 = por %p88, %p89
      %p91 = scmp.ne.s32.totalorder %s80, %s83
      %p92 = scmp.eq.s32.totalorder %s23, 1
      %p93 = por %p91, %p92
      %p94 = scmp.ne.s32.totalorder %s83, %s84
      %p95 = scmp.eq.s32.totalorder %s23, 0
      %p96 = por %p94, %p95
      %p97 = scmp.ne.s32.totalorder %s83, %s84
      %p98 = scmp.eq.s32.totalorder %s24, 1
      %p99 = por %p97, %p98
      %p101 = scmp.ne.s32.totalorder %s84, %s100
      %p102 = scmp.eq.s32.totalorder %s24, 0
      %p103 = por %p101, %p102
      %s105 = sadd.s32 %s104, 1
      %p108 = scmp.eq.s32.totalorder %s18, 1
      %p109 = scmp.ne.s32.totalorder %s104, %s106
      %p110 = scmp.eq.s32.totalorder %s18, 0
      %p111 = por %p109, %p110
      %p112 = scmp.ne.s32.totalorder %s104, %s106
      %p113 = scmp.eq.s32.totalorder %s23, 1
      %p114 = por %p112, %p113
      %p115 = scmp.ne.s32.totalorder %s106, %s107
      %p116 = scmp.eq.s32.totalorder %s23, 0
      %p117 = por %p115, %p116
      %p118 = scmp.ne.s32.totalorder %s106, %s107
      %p119 = scmp.eq.s32.totalorder %s24, 1
      %p120 = por %p118, %p119
      %p122 = scmp.ne.s32.totalorder %s107, %s121
      %p123 = scmp.eq.s32.totalorder %s24, 0
      %p124 = por %p122, %p123
      %s126 = sadd.s32 %s125, 1
      %p129 = scmp.eq.s32.totalorder %s18, 1
      %p130 = scmp.ne.s32.totalorder %s125, %s127
      %p131 = scmp.eq.s32.totalorder %s18, 0
      %p132 = por %p130, %p131
      %p133 = scmp.ne.s32.totalorder %s125, %s127
      %p134 = scmp.eq.s32.totalorder %s23, 1
      %p135 = por %p133, %p134
      %p136 = scmp.ne.s32.totalorder %s127, %s128
      %p137 = scmp.eq.s32.totalorder %s23, 0
      %p138 = por %p136, %p137
      %p139 = scmp.ne.s32.totalorder %s127, %s128
      %p140 = scmp.eq.s32.totalorder %s24, 1
      %p141 = por %p139, %p140
      %p143 = scmp.ne.s32.totalorder %s128, %s142
      %p144 = scmp.eq.s32.totalorder %s24, 0
      %p145 = por %p143, %p144
      %s147 = sadd.s32 %s146, 1
      %p150 = scmp.eq.s32.totalorder %s18, 1
      %p151 = scmp.ne.s32.totalorder %s146, %s148
      %p152 = scmp.eq.s32.totalorder %s18, 0
      %p153 = por %p151, %p152
      %p154 = scmp.ne.s32.totalorder %s146, %s148
      %p155 = scmp.eq.s32.totalorder %s23, 1
      %p156 = por %p154, %p155
      %p157 = scmp.ne.s32.totalorder %s148, %s149
      %p158 = scmp.eq.s32.totalorder %s23, 0
      %p159 = por %p157, %p158
      %p160 = scmp.ne.s32.totalorder %s148, %s149
      %p161 = scmp.eq.s32.totalorder %s24, 1
      %p162 = por %p160, %p161
      %p164 = scmp.ne.s32.totalorder %s149, %s163
      %p165 = scmp.eq.s32.totalorder %s24, 0
      %p166 = por %p164, %p165
      %s168 = sadd.s32 %s167, 1
      %p171 = scmp.eq.s32.totalorder %s18, 1
      %p172 = scmp.ne.s32.totalorder %s167, %s169
      %p173 = scmp.eq.s32.totalorder %s18, 0
      %p174 = por %p172, %p173
      %p175 = scmp.ne.s32.totalorder %s167, %s169
      %p176 = scmp.eq.s32.totalorder %s23, 1
      %p177 = por %p175, %p176
      %p178 = scmp.ne.s32.totalorder %s169, %s170
      %p179 = scmp.eq.s32.totalorder %s23, 0
      %p180 = por %p178, %p179
      %p181 = scmp.ne.s32.totalorder %s169, %s170
      %p182 = scmp.eq.s32.totalorder %s24, 1
      %p183 = por %p181, %p182
      %p185 = scmp.ne.s32.totalorder %s170, %s184
      %p186 = scmp.eq.s32.totalorder %s24, 0
      %p187 = por %p185, %p186
      %s189 = sadd.s32 %s188, 1
      %p192 = scmp.eq.s32.totalorder %s18, 1
      %p193 = scmp.ne.s32.totalorder %s188, %s190
      %p194 = scmp.eq.s32.totalorder %s18, 0
      %p195 = por %p193, %p194
      %p196 = scmp.ne.s32.totalorder %s188, %s190
      %p197 = scmp.eq.s32.totalorder %s23, 1
      %p198 = por %p196, %p197
      %p199 = scmp.ne.s32.totalorder %s190, %s191
      %p200 = scmp.eq.s32.totalorder %s23, 0
      %p201 = por %p199, %p200
      %p202 = scmp.ne.s32.totalorder %s190, %s191
      %p203 = scmp.eq.s32.totalorder %s24, 1
      %p204 = por %p202, %p203
      %p206 = scmp.ne.s32.totalorder %s191, %s205
      %p207 = scmp.eq.s32.totalorder %s24, 0
      %p208 = por %p206, %p207
      %s209 = ssub.s32 %s18, %s25
      %p210 = scmp.eq.s32.totalorder %s209, 0
      %s212 = sadd.s32 %s211, 1
      %s213 = scalar_select %p210, %s211, %s212
      %p216 = pneg %p210
      %p217 = scmp.eq.s32.totalorder %s18, 1
      %p218 = por %p216, %p217
      %p219 = scmp.ne.s32.totalorder %s211, %s214
      %p220 = scmp.eq.s32.totalorder %s18, 0
      %p221 = por %p219, %p220
      %p222 = scmp.ne.s32.totalorder %s211, %s214
      %p223 = scmp.eq.s32.totalorder %s23, 1
      %p224 = por %p222, %p223
      %p225 = scmp.ne.s32.totalorder %s214, %s215
      %p226 = scmp.eq.s32.totalorder %s23, 0
      %p227 = por %p225, %p226
      %p228 = scmp.ne.s32.totalorder %s214, %s215
      %p229 = scmp.eq.s32.totalorder %s24, 1
      %p230 = por %p228, %p229
      %p232 = scmp.ne.s32.totalorder %s215, %s231
      %p233 = scmp.eq.s32.totalorder %s24, 0
      %p234 = por %p232, %p233
      %p235 = scmp.le.s32.totalorder 1, %s18
      %p236 = scmp.lt.s32.totalorder %s18, 3
      %p237 = pnand %p235, %p236
      %p238 = pneg %p237
      // Predicated region
      $region9: #{tpu_custom_call.1} parent=5 // pred_check
        _
      $region10: #{tpu_custom_call.1} parent=5 // pred_check_branch
        %240 = sbr.rel (%p237) target = $region12
      $region11: #{tpu_custom_call.1} parent=5 // pred_region
        %s241 = ssub.s32 %s18, 1
        // Predicated region
        $region13: #{tpu_custom_call.1} parent=11 // pred_check
          %p242 = pneg %p117
        $region14: #{tpu_custom_call.1} parent=11 // pred_check_branch
          %244 = sbr.rel (%p242) target = $region16
        $region15: #{tpu_custom_call.1} parent=11 // pred_region
          %s246 = ssub.s32 6144, 6144
          %247 = vsyncadd [#allocation3], %s246
          %s248 = sshll.u32 [#allocation2], 4
          %s249 = int_to_ptr.vmem [resolvable:$true] %s248
          %254 = dma.hbm_to_vmem [thread:$0]  %s3, 6144, %s249, [#allocation3], 384, 384, 24
        $region16: #{tpu_custom_call.1} parent=11 // pred_fallthru
          _
        // Predicated region
        $region17: #{tpu_custom_call.1} parent=11 // pred_check
          %p255 = pneg %p138
        $region18: #{tpu_custom_call.1} parent=11 // pred_check_branch
          %257 = sbr.rel (%p255) target = $region20
        $region19: #{tpu_custom_call.1} parent=11 // pred_region
          _
        $region20: #{tpu_custom_call.1} parent=11 // pred_fallthru
          _
        // Predicated region
        $region21: #{tpu_custom_call.1} parent=11 // pred_check
          %p258 = pneg %p159
        $region22: #{tpu_custom_call.1} parent=11 // pred_check_branch
          %260 = sbr.rel (%p258) target = $region24
        $region23: #{tpu_custom_call.1} parent=11 // pred_region
          _
        $region24: #{tpu_custom_call.1} parent=11 // pred_fallthru
          _
        // Predicated region
        $region25: #{tpu_custom_call.1} parent=11 // pred_check
          %p261 = pneg %p180
        $region26: #{tpu_custom_call.1} parent=11 // pred_check_branch
          %263 = sbr.rel (%p261) target = $region28
        $region27: #{tpu_custom_call.1} parent=11 // pred_region
          _
        $region28: #{tpu_custom_call.1} parent=11 // pred_fallthru
          _
        // Predicated region
        $region29: #{tpu_custom_call.1} parent=11 // pred_check
          %p264 = pneg %p201
        $region30: #{tpu_custom_call.1} parent=11 // pred_check_branch
          %266 = sbr.rel (%p264) target = $region32
        $region31: #{tpu_custom_call.1} parent=11 // pred_region
          _
        $region32: #{tpu_custom_call.1} parent=11 // pred_fallthru
          _
      $region12: #{tpu_custom_call.1} parent=5 // pred_fallthru
        _
      %p267 = scmp.lt.s32.totalorder %s18, 2
      // Predicated region
      $region33: #{tpu_custom_call.1} parent=5 // pred_check
        %p268 = pneg %p267
      $region34: #{tpu_custom_call.1} parent=5 // pred_check_branch
        %270 = sbr.rel (%p268) target = $region36
      $region35: #{tpu_custom_call.1} parent=5 // pred_region
        // Predicated region
        $region37: #{tpu_custom_call.1} parent=35 // pred_check
          %p271 = pneg %p38
        $region38: #{tpu_custom_call.1} parent=35 // pred_check_branch
          %273 = sbr.rel (%p271) target = $region40
        $region39: #{tpu_custom_call.1} parent=35 // pred_region
          %p274 = scmp.lt.s32.totalorder %s18, 1
          %s275 = scalar_select %p274, %s18, 1
          %s276 = smul.addr %s275, 4
          %s277 = scalar_lea.vmem %s0, %s276
        $region40: #{tpu_custom_call.1} parent=35 // pred_fallthru
          _
        // Predicated region
        $region41: #{tpu_custom_call.1} parent=35 // pred_check
          %p278 = pneg %p64
        $region42: #{tpu_custom_call.1} parent=35 // pred_check_branch
          %280 = sbr.rel (%p278) target = $region44
        $region43: #{tpu_custom_call.1} parent=35 // pred_region
          %p281 = scmp.lt.s32.totalorder %s18, 1
          %s282 = scalar_select %p281, %s18, 1
          %s283 = smul.addr %s282, 4
          %s284 = scalar_lea.vmem %s1, %s283
        $region44: #{tpu_custom_call.1} parent=35 // pred_fallthru
          _
        // Predicated region
        $region45: #{tpu_custom_call.1} parent=35 // pred_check
          %p285 = pneg %p90
        $region46: #{tpu_custom_call.1} parent=35 // pred_check_branch
          %287 = sbr.rel (%p285) target = $region48
        $region47: #{tpu_custom_call.1} parent=35 // pred_region
          %p288 = scmp.lt.s32.totalorder %s18, 1
          %s289 = scalar_select %p288, %s18, 1
          %s290 = scalar_lea.vmem %s2, %s289
        $region48: #{tpu_custom_call.1} parent=35 // pred_fallthru
          _
      $region36: #{tpu_custom_call.1} parent=5 // pred_fallthru
        _
      %p291 = scmp.le.s32.totalorder 1, %s18
      %p292 = scmp.lt.s32.totalorder %s18, 3
      %p293 = pnand %p291, %p292
      %p294 = pneg %p293
      // Predicated region
      $region49: #{tpu_custom_call.1} parent=5 // pred_check
        _
      $region50: #{tpu_custom_call.1} parent=5 // pred_check_branch
        %296 = sbr.rel (%p293) target = $region52
      $region51: #{tpu_custom_call.1} parent=5 // pred_region
        %s297 = ssub.s32 %s18, 1
        // Predicated region
        $region53: #{tpu_custom_call.1} parent=51 // pred_check
          %p298 = pneg %p117
        $region54: #{tpu_custom_call.1} parent=51 // pred_check_branch
          %300 = sbr.rel (%p298) target = $region56
        $region55: #{tpu_custom_call.1} parent=51 // pred_region
          %301 = dma.done [#allocation3], 6144
        $region56: #{tpu_custom_call.1} parent=51 // pred_fallthru
          _
        %p302 = scmp.lt.s32.totalorder %s23, 1
        %s303 = scalar_select %p302, %s23, 1
        %s304 = smul.addr %s303, 4
        %s305 = scalar_lea.vmem %s0, %s304
        %p306 = pneg %p44
        %p307 = pneg %p41
        %p308 = scmp.lt.s32.totalorder %s23, 1
        %s309 = scalar_select %p308, %s23, 1
        %s310 = smul.addr %s309, 4
        %s311 = scalar_lea.vmem %s1, %s310
        %p312 = pneg %p70
        %p313 = pneg %p67
        %p314 = scmp.lt.s32.totalorder %s23, 1
        %s315 = scalar_select %p314, %s23, 1
        %s316 = scalar_lea.vmem %s2, %s315
        %p317 = pneg %p96
        %p318 = pneg %p93
        %p319 = pneg %p117
        %p320 = pneg %p114
        %p321 = pneg %p138
        %p322 = pneg %p135
        %p323 = pneg %p159
        %p324 = pneg %p156
        %p325 = pneg %p180
        %p326 = pneg %p177
        %p327 = pneg %p201
        %p328 = pneg %p198
        %p329 = pneg %p227
        %p330 = pneg %p224
        %s331 = sand.u32 %s214, 1
        %s332 = scalar_lea.sflag [#allocation4], %s331
        %s333 = sand.u32 %s214, 1
        %s334 = scalar_lea.vmem [#allocation5], %s333
        %p335 = scmp.lt.s32.totalorder %s23, 1
        %s336 = scalar_select %p335, %s23, 1
        %s337 = smul.addr %s336, 4
        %s338 = scalar_lea.vmem %s0, %s337
        %p339 = scmp.lt.s32.totalorder %s23, 1
        %s340 = scalar_select %p339, %s23, 1
        %s341 = smul.addr %s340, 4
        %s342 = scalar_lea.vmem %s1, %s341
        %p343 = scmp.lt.s32.totalorder %s23, 1
        %s344 = scalar_select %p343, %s23, 1
        %s345 = scalar_lea.vmem %s2, %s344
        %v347 = vld [vmem:[%s342] sm:$0xf]
        %v348 = vld [vmem:[#allocation2] sm:$0xff]
        %v349 = vld [vmem:[#allocation2 + $0x8] sm:$0xff]
        %v350 = vld [vmem:[#allocation2 + $0x10] sm:$0xff]
        %v351 = vld [vmem:[#allocation2 + $0x18] sm:$0xff]
        %v352 = vld [vmem:[#allocation2 + $0x20] sm:$0xff]
        %v353 = vld [vmem:[#allocation2 + $0x28] sm:$0xff]
        %v354 = vld [vmem:[#allocation2 + $0x30] sm:$0xff]
        %v355 = vld [vmem:[#allocation2 + $0x38] sm:$0xff]
        %v356 = vld [vmem:[#allocation2 + $0x40] sm:$0xff]
        %v357 = vld [vmem:[#allocation2 + $0x48] sm:$0xff]
        %v358 = vld [vmem:[#allocation2 + $0x50] sm:$0xff]
        %v359 = vld [vmem:[#allocation2 + $0x58] sm:$0xff]
        %v360 = vld [vmem:[#allocation2 + $0x60] sm:$0xff]
        %v361 = vld [vmem:[#allocation2 + $0x68] sm:$0xff]
        %v362 = vld [vmem:[#allocation2 + $0x70] sm:$0xff]
        %v363 = vld [vmem:[#allocation2 + $0x78] sm:$0xff]
        %v364 = vld [vmem:[#allocation2 + $0x80] sm:$0xff]
        %v365 = vld [vmem:[#allocation2 + $0x88] sm:$0xff]
        %v366 = vld [vmem:[#allocation2 + $0x90] sm:$0xff]
        %v367 = vld [vmem:[#allocation2 + $0x98] sm:$0xff]
        %v368 = vld [vmem:[#allocation2 + $0xa0] sm:$0xff]
        %v369 = vld [vmem:[#allocation2 + $0xa8] sm:$0xff]
        %v370 = vld [vmem:[#allocation2 + $0xb0] sm:$0xff]
        %v371 = vld [vmem:[#allocation2 + $0xb8] sm:$0xff]
        %v372 = vld [vmem:[#allocation2 + $0xc0] sm:$0xff]
        %v373 = vld [vmem:[#allocation2 + $0xc8] sm:$0xff]
        %v374 = vld [vmem:[#allocation2 + $0xd0] sm:$0xff]
        %v375 = vld [vmem:[#allocation2 + $0xd8] sm:$0xff]
        %v376 = vld [vmem:[#allocation2 + $0xe0] sm:$0xff]
        %v377 = vld [vmem:[#allocation2 + $0xe8] sm:$0xff]
        %v378 = vld [vmem:[#allocation2 + $0xf0] sm:$0xff]
        %v379 = vld [vmem:[#allocation2 + $0xf8] sm:$0xff]
        %v380 = vld [vmem:[#allocation2 + $0x100] sm:$0xff]
        %v381 = vld [vmem:[#allocation2 + $0x108] sm:$0xff]
        %v382 = vld [vmem:[#allocation2 + $0x110] sm:$0xff]
        %v383 = vld [vmem:[#allocation2 + $0x118] sm:$0xff]
        %v384 = vld [vmem:[#allocation2 + $0x120] sm:$0xff]
        %v385 = vld [vmem:[#allocation2 + $0x128] sm:$0xff]
        %v386 = vld [vmem:[#allocation2 + $0x130] sm:$0xff]
        %v387 = vld [vmem:[#allocation2 + $0x138] sm:$0xff]
        %v388 = vld [vmem:[#allocation2 + $0x140] sm:$0xff]
        %v389 = vld [vmem:[#allocation2 + $0x148] sm:$0xff]
        %v390 = vld [vmem:[#allocation2 + $0x150] sm:$0xff]
        %v391 = vld [vmem:[#allocation2 + $0x158] sm:$0xff]
        %v392 = vld [vmem:[#allocation2 + $0x160] sm:$0xff]
        %v393 = vld [vmem:[#allocation2 + $0x168] sm:$0xff]
        %v394 = vld [vmem:[#allocation2 + $0x170] sm:$0xff]
        %v395 = vld [vmem:[#allocation2 + $0x178] sm:$0xff]
        %v396 = vld [vmem:[%s4] sm:$0x3f]
        %v398 = vlaneseq
        %v399 = vshrl.u32 %v398, 7
        %v400 = vsub.s32 0, %v399
        %v401 = vrot.slane %v396, %v400
        %v402 = vlaneseq
        %v403 = vshrl.u32 %v402, 7
        %v404 = vsub.s32 1, %v403
        %v405 = vrot.slane %v396, %v404
        %v406 = vlaneseq
        %v407 = vshrl.u32 %v406, 7
        %v408 = vsub.s32 2, %v407
        %v409 = vrot.slane %v396, %v408
        %v410 = vlaneseq
        %v411 = vshrl.u32 %v410, 7
        %v412 = vsub.s32 3, %v411
        %v413 = vrot.slane %v396, %v412
        %v414 = vlaneseq
        %v415 = vshrl.u32 %v414, 7
        %v416 = vsub.s32 4, %v415
        %v417 = vrot.slane %v396, %v416
        %v418 = vlaneseq
        %v419 = vshrl.u32 %v418, 7
        %v420 = vsub.s32 5, %v419
        %v421 = vrot.slane %v396, %v420
        %v476 = vunpack.c.l.b16 %v348
        %v477 = vunpack.c.h.b16 %v348
        %v478 = vunpack.c.l.b16 %v349
        %v479 = vunpack.c.h.b16 %v349
        %v480 = vunpack.c.l.b16 %v350
        %v481 = vunpack.c.h.b16 %v350
        %v482 = vunpack.c.l.b16 %v351
        %v483 = vunpack.c.h.b16 %v351
        %v484 = vunpack.c.l.b16 %v352
        %v485 = vunpack.c.h.b16 %v352
        %v486 = vunpack.c.l.b16 %v353
        %v487 = vunpack.c.h.b16 %v353
        %v488 = vunpack.c.l.b16 %v354
        %v489 = vunpack.c.h.b16 %v354
        %v490 = vunpack.c.l.b16 %v355
        %v491 = vunpack.c.h.b16 %v355
        %v492 = vunpack.c.l.b16 %v356
        %v493 = vunpack.c.h.b16 %v356
        %v494 = vunpack.c.l.b16 %v357
        %v495 = vunpack.c.h.b16 %v357
        %v496 = vunpack.c.l.b16 %v358
        %v497 = vunpack.c.h.b16 %v358
        %v498 = vunpack.c.l.b16 %v359
        %v499 = vunpack.c.h.b16 %v359
        %v500 = vunpack.c.l.b16 %v360
        %v501 = vunpack.c.h.b16 %v360
        %v502 = vunpack.c.l.b16 %v361
        %v503 = vunpack.c.h.b16 %v361
        %v504 = vunpack.c.l.b16 %v362
        %v505 = vunpack.c.h.b16 %v362
        %v506 = vunpack.c.l.b16 %v363
        %v507 = vunpack.c.h.b16 %v363
        %v508 = vunpack.c.l.b16 %v364
        %v509 = vunpack.c.h.b16 %v364
        %v510 = vunpack.c.l.b16 %v365
        %v511 = vunpack.c.h.b16 %v365
        %v512 = vunpack.c.l.b16 %v366
        %v513 = vunpack.c.h.b16 %v366
        %v514 = vunpack.c.l.b16 %v367
        %v515 = vunpack.c.h.b16 %v367
        %v516 = vunpack.c.l.b16 %v368
        %v517 = vunpack.c.h.b16 %v368
        %v518 = vunpack.c.l.b16 %v369
        %v519 = vunpack.c.h.b16 %v369
        %v520 = vunpack.c.l.b16 %v370
        %v521 = vunpack.c.h.b16 %v370
        %v522 = vunpack.c.l.b16 %v371
        %v523 = vunpack.c.h.b16 %v371
        %v524 = vunpack.c.l.b16 %v372
        %v525 = vunpack.c.h.b16 %v372
        %v526 = vunpack.c.l.b16 %v373
        %v527 = vunpack.c.h.b16 %v373
        %v528 = vunpack.c.l.b16 %v374
        %v529 = vunpack.c.h.b16 %v374
        %v530 = vunpack.c.l.b16 %v375
        %v531 = vunpack.c.h.b16 %v375
        %v532 = vunpack.c.l.b16 %v376
        %v533 = vunpack.c.h.b16 %v376
        %v534 = vunpack.c.l.b16 %v377
        %v535 = vunpack.c.h.b16 %v377
        %v536 = vunpack.c.l.b16 %v378
        %v537 = vunpack.c.h.b16 %v378
        %v538 = vunpack.c.l.b16 %v379
        %v539 = vunpack.c.h.b16 %v379
        %v540 = vunpack.c.l.b16 %v380
        %v541 = vunpack.c.h.b16 %v380
        %v542 = vunpack.c.l.b16 %v381
        %v543 = vunpack.c.h.b16 %v381
        %v544 = vunpack.c.l.b16 %v382
        %v545 = vunpack.c.h.b16 %v382
        %v546 = vunpack.c.l.b16 %v383
        %v547 = vunpack.c.h.b16 %v383
        %v548 = vunpack.c.l.b16 %v384
        %v549 = vunpack.c.h.b16 %v384
        %v550 = vunpack.c.l.b16 %v385
        %v551 = vunpack.c.h.b16 %v385
        %v552 = vunpack.c.l.b16 %v386
        %v553 = vunpack.c.h.b16 %v386
        %v554 = vunpack.c.l.b16 %v387
        %v555 = vunpack.c.h.b16 %v387
        %v556 = vunpack.c.l.b16 %v388
        %v557 = vunpack.c.h.b16 %v388
        %v558 = vunpack.c.l.b16 %v389
        %v559 = vunpack.c.h.b16 %v389
        %v560 = vunpack.c.l.b16 %v390
        %v561 = vunpack.c.h.b16 %v390
        %v562 = vunpack.c.l.b16 %v391
        %v563 = vunpack.c.h.b16 %v391
        %v564 = vunpack.c.l.b16 %v392
        %v565 = vunpack.c.h.b16 %v392
        %v566 = vunpack.c.l.b16 %v393
        %v567 = vunpack.c.h.b16 %v393
        %v568 = vunpack.c.l.b16 %v394
        %v569 = vunpack.c.h.b16 %v394
        %v570 = vunpack.c.l.b16 %v395
        %v571 = vunpack.c.h.b16 %v395
        %v572 = vpack.c.b16 %v482, %v476
        %v573 = vpack.c.b16 %v483, %v477
        %v574 = vpack.c.b16 %v484, %v478
        %v575 = vpack.c.b16 %v485, %v479
        %v576 = vpack.c.b16 %v486, %v480
        %v577 = vpack.c.b16 %v487, %v481
        %v578 = vpack.c.b16 %v494, %v488
        %v579 = vpack.c.b16 %v495, %v489
        %v580 = vpack.c.b16 %v496, %v490
        %v581 = vpack.c.b16 %v497, %v491
        %v582 = vpack.c.b16 %v498, %v492
        %v583 = vpack.c.b16 %v499, %v493
        %v584 = vpack.c.b16 %v506, %v500
        %v585 = vpack.c.b16 %v507, %v501
        %v586 = vpack.c.b16 %v508, %v502
        %v587 = vpack.c.b16 %v509, %v503
        %v588 = vpack.c.b16 %v510, %v504
        %v589 = vpack.c.b16 %v511, %v505
        %v590 = vpack.c.b16 %v518, %v512
        %v591 = vpack.c.b16 %v519, %v513
        %v592 = vpack.c.b16 %v520, %v514
        %v593 = vpack.c.b16 %v521, %v515
        %v594 = vpack.c.b16 %v522, %v516
        %v595 = vpack.c.b16 %v523, %v517
        %v596 = vpack.c.b16 %v530, %v524
        %v597 = vpack.c.b16 %v531, %v525
        %v598 = vpack.c.b16 %v532, %v526
        %v599 = vpack.c.b16 %v533, %v527
        %v600 = vpack.c.b16 %v534, %v528
        %v601 = vpack.c.b16 %v535, %v529
        %v602 = vpack.c.b16 %v542, %v536
        %v603 = vpack.c.b16 %v543, %v537
        %v604 = vpack.c.b16 %v544, %v538
        %v605 = vpack.c.b16 %v545, %v539
        %v606 = vpack.c.b16 %v546, %v540
        %v607 = vpack.c.b16 %v547, %v541
        %v608 = vpack.c.b16 %v554, %v548
        %v609 = vpack.c.b16 %v555, %v549
        %v610 = vpack.c.b16 %v556, %v550
        %v611 = vpack.c.b16 %v557, %v551
        %v612 = vpack.c.b16 %v558, %v552
        %v613 = vpack.c.b16 %v559, %v553
        %v614 = vpack.c.b16 %v566, %v560
        %v615 = vpack.c.b16 %v567, %v561
        %v616 = vpack.c.b16 %v568, %v562
        %v617 = vpack.c.b16 %v569, %v563
        %v618 = vpack.c.b16 %v570, %v564
        %v619 = vpack.c.b16 %v571, %v565
        %668 = vmatprep.subr.bf16.mxu0 %v573
        %669 = vmatpush1.bf16.msra.mxu0 %v572
        %670 = vmatprep.subr.bf16.mxu0 %v579
        %671 = vmatpush1.bf16.msra.mxu0 %v578
        %672 = vmatprep.subr.bf16.mxu0 %v585
        %673 = vmatpush1.bf16.msra.mxu0 %v584
        %674 = vmatprep.subr.bf16.mxu0 %v591
        %675 = vmatpush1.bf16.msra.mxu0 %v590
        %676 = vmatprep.subr.bf16.mxu0 %v597
        %677 = vmatpush1.bf16.msra.mxu0 %v596
        %678 = vmatprep.subr.bf16.mxu0 %v603
        %679 = vmatpush1.bf16.msra.mxu0 %v602
        %680 = vmatprep.subr.bf16.mxu0 %v609
        %681 = vmatpush1.bf16.msra.mxu0 %v608
        %682 = vmatprep.subr.bf16.mxu0 %v615
        %683 = vmatpush1.bf16.msra.mxu0 %v614
        %684 = vmatprep.subr.bf16.mxu0 0
        %685 = vmatpush1.bf16.msra.mxu0 0
        %686 = vmatprep.subr.bf16.mxu0 0
        %687 = vmatpush1.bf16.msra.mxu0 0
        %688 = vmatprep.subr.bf16.mxu0 0
        %689 = vmatpush1.bf16.msra.mxu0 0
        %690 = vmatprep.subr.bf16.mxu0 0
        %691 = vmatpush1.bf16.msra.mxu0 0
        %692 = vmatprep.subr.bf16.mxu0 0
        %693 = vmatpush1.bf16.msra.mxu0 0
        %694 = vmatprep.subr.bf16.mxu0 0
        %695 = vmatpush1.bf16.msra.mxu0 0
        %696 = vmatprep.subr.bf16.mxu0 0
        %697 = vmatpush1.bf16.msra.mxu0 0
        %698 = vmatprep.subr.bf16.mxu0 0
        %699 = vmatpush1.bf16.msra.mxu0 0
        %700 = vmatprep.mubr.bf16.mxu0 0
        %701 = vmatmul.mubr.bf16.gmra.mrb[0].mxu0 %v347
        %v702 = vpop.f32.mrb[0].mxu0
        %v703 = vadd.f32 %v401, %v702
        %v704 = vpop.f32.mrb[0].mxu0
        %v705 = vadd.f32 %v405, %v704
        %v706 = vpop.f32.mrb[0].mxu0
        %v707 = vpop.f32.mrb[0].mxu0
        %708 = vdwg.mxu0
        %709 = vmatprep.subr.bf16.mxu0 %v575
        %710 = vmatpush1.bf16.msra.mxu0 %v574
        %711 = vmatprep.subr.bf16.mxu0 %v581
        %712 = vmatpush1.bf16.msra.mxu0 %v580
        %713 = vmatprep.subr.bf16.mxu0 %v587
        %714 = vmatpush1.bf16.msra.mxu0 %v586
        %715 = vmatprep.subr.bf16.mxu0 %v593
        %716 = vmatpush1.bf16.msra.mxu0 %v592
        %717 = vmatprep.subr.bf16.mxu0 %v599
        %718 = vmatpush1.bf16.msra.mxu0 %v598
        %719 = vmatprep.subr.bf16.mxu0 %v605
        %720 = vmatpush1.bf16.msra.mxu0 %v604
        %721 = vmatprep.subr.bf16.mxu0 %v611
        %722 = vmatpush1.bf16.msra.mxu0 %v610
        %723 = vmatprep.subr.bf16.mxu0 %v617
        %724 = vmatpush1.bf16.msra.mxu0 %v616
        %725 = vmatprep.subr.bf16.mxu0 0
        %726 = vmatpush1.bf16.msra.mxu0 0
        %727 = vmatprep.subr.bf16.mxu0 0
        %728 = vmatpush1.bf16.msra.mxu0 0
        %729 = vmatprep.subr.bf16.mxu0 0
        %730 = vmatpush1.bf16.msra.mxu0 0
        %731 = vmatprep.subr.bf16.mxu0 0
        %732 = vmatpush1.bf16.msra.mxu0 0
        %733 = vmatprep.subr.bf16.mxu0 0
        %734 = vmatpush1.bf16.msra.mxu0 0
        %735 = vmatprep.subr.bf16.mxu0 0
        %736 = vmatpush1.bf16.msra.mxu0 0
        %737 = vmatprep.subr.bf16.mxu0 0
        %738 = vmatpush1.bf16.msra.mxu0 0
        %739 = vmatprep.subr.bf16.mxu0 0
        %740 = vmatpush1.bf16.msra.mxu0 0
        %741 = vmatprep.mubr.bf16.mxu0 0
        %742 = vmatmul.mubr.bf16.gmra.mrb[0].mxu0 %v347
        %v743 = vpop.f32.mrb[0].mxu0
        %v744 = vadd.f32 %v409, %v743
        %v745 = vpop.f32.mrb[0].mxu0
        %v746 = vadd.f32 %v413, %v745
        %v747 = vpop.f32.mrb[0].mxu0
        %v748 = vpop.f32.mrb[0].mxu0
        %749 = vdwg.mxu0
        %750 = vmatprep.subr.bf16.mxu0 %v577
        %751 = vmatpush1.bf16.msra.mxu0 %v576
        %752 = vmatprep.subr.bf16.mxu0 %v583
        %753 = vmatpush1.bf16.msra.mxu0 %v582
        %754 = vmatprep.subr.bf16.mxu0 %v589
        %755 = vmatpush1.bf16.msra.mxu0 %v588
        %756 = vmatprep.subr.bf16.mxu0 %v595
        %757 = vmatpush1.bf16.msra.mxu0 %v594
        %758 = vmatprep.subr.bf16.mxu0 %v601
        %759 = vmatpush1.bf16.msra.mxu0 %v600
        %760 = vmatprep.subr.bf16.mxu0 %v607
        %761 = vmatpush1.bf16.msra.mxu0 %v606
        %762 = vmatprep.subr.bf16.mxu0 %v613
        %763 = vmatpush1.bf16.msra.mxu0 %v612
        %764 = vmatprep.subr.bf16.mxu0 %v619
        %765 = vmatpush1.bf16.msra.mxu0 %v618
        %766 = vmatprep.subr.bf16.mxu0 0
        %767 = vmatpush1.bf16.msra.mxu0 0
        %768 = vmatprep.subr.bf16.mxu0 0
        %769 = vmatpush1.bf16.msra.mxu0 0
        %770 = vmatprep.subr.bf16.mxu0 0
        %771 = vmatpush1.bf16.msra.mxu0 0
        %772 = vmatprep.subr.bf16.mxu0 0
        %773 = vmatpush1.bf16.msra.mxu0 0
        %774 = vmatprep.subr.bf16.mxu0 0
        %775 = vmatpush1.bf16.msra.mxu0 0
        %776 = vmatprep.subr.bf16.mxu0 0
        %777 = vmatpush1.bf16.msra.mxu0 0
        %778 = vmatprep.subr.bf16.mxu0 0
        %779 = vmatpush1.bf16.msra.mxu0 0
        %780 = vmatprep.subr.bf16.mxu0 0
        %781 = vmatpush1.bf16.msra.mxu0 0
        %782 = vmatprep.mubr.bf16.mxu0 0
        %783 = vmatmul.mubr.bf16.gmra.mrb[0].mxu0 %v347
        %v784 = vpop.f32.mrb[0].mxu0
        %v785 = vadd.f32 %v417, %v784
        %v786 = vpop.f32.mrb[0].mxu0
        %v787 = vadd.f32 %v421, %v786
        %v788 = vpop.f32.mrb[0].mxu0
        %v789 = vpop.f32.mrb[0].mxu0
        %790 = vdwg.mxu0
        %v791 = vmax.f32 %v703, 0.0
        %v792 = vmax.f32 %v705, 0.0
        %v793 = vmax.f32 %v744, 0.0
        %v794 = vmax.f32 %v746, 0.0
        %v795 = vmax.f32 %v785, 0.0
        %v796 = vmax.f32 %v787, 0.0
        %v797 = vmax.f32 %v791, %v792
        %v798 = vmax.f32 %v797, %v793
        %v799 = vmax.f32 %v798, %v794
        %v800 = vmax.f32 %v799, %v795
        %v801 = vmax.f32 %v800, %v796
        %v802 = vld [vmem:[%s345] sm:$0x1]
        %v803 = vlaneseq
        %v804 = vshrl.u32 %v803, 7
        %v805 = vlaneseq
        %v806 = vshrl.u32 %v805, 7
        %v807 = vsub.s32 0, %v806
        %v808 = vrot.slane %v802, %v807
        %vm809 = vcmp.lt.s32.totalorder %v804, %v808
        %v810 = vld [vmem:[%s338] sm:$0xf]
        %v811 = vsel %vm809, 1, 0
        %v812 = vcvt.s32.f32 %v811
        %v813 = vpack.c.bf16 %v812, %v812
        %815 = vset.pattern.permute.xlu0 0
        %816 = vperm.xlu0 %815, %v813
        %v817 = vpop.permute.xlu0 %816
        %v819 = vmul.bf16 %v810, %v817
        %v820 = vunpack.c.l.bf16 %v819
        %vm821 = vcmask 261120
        %v822 = vsel %vm821, %v820, 0.0
        %v823 = vrot.slane %v822, 4
        %v824 = vadd.f32 %v822, %v823
        %v825 = vrot.slane %v824, 2
        %v826 = vadd.f32 %v824, %v825
        %v827 = vrot.slane %v826, 1
        %v828 = vadd.f32 %v826, %v827
        %v829 = vmul.f32 %v828, 0.125
        %831 = vset.pattern.permute.xlu0 0
        %832 = vperm.xlu0 %831, %v812
        %v833 = vpop.permute.xlu0 %832
        %v835 = vmul.f32 %v801, %v833
        %v836 = vrot.slane %v835, 4
        %v837 = vadd.f32 %v835, %v836
        %v838 = vrot.slane %v837, 2
        %v839 = vadd.f32 %v837, %v838
        %v840 = vrot.slane %v839, 1
        %v841 = vadd.f32 %v839, %v840
        %v842 = vmul.f32 %v841, 0.125
        %v843 = vld [vmem:[%s5] sm:$0xff]
        %v844 = vld [vmem:[%s5 + $0x8] sm:$0xff]
        %v845 = vld [vmem:[%s5 + $0x10] sm:$0xff]
        %v846 = vld [vmem:[%s5 + $0x18] sm:$0xff]
        %v847 = vld [vmem:[%s6] sm:$0xff]
        %v848 = vld [vmem:[%s6 + $0x8] sm:$0xff]
        %v849 = vld [vmem:[%s6 + $0x10] sm:$0xff]
        %v850 = vld [vmem:[%s6 + $0x18] sm:$0xff]
        %v851 = vld [vmem:[%s6 + $0x20] sm:$0xff]
        %v852 = vld [vmem:[%s6 + $0x28] sm:$0xff]
        %v853 = vld [vmem:[%s6 + $0x30] sm:$0xff]
        %v854 = vld [vmem:[%s6 + $0x38] sm:$0xff]
        %v855 = vld [vmem:[%s6 + $0x40] sm:$0xff]
        %v856 = vld [vmem:[%s6 + $0x48] sm:$0xff]
        %v857 = vld [vmem:[%s6 + $0x50] sm:$0xff]
        %v858 = vld [vmem:[%s6 + $0x58] sm:$0xff]
        %v859 = vld [vmem:[%s6 + $0x60] sm:$0xff]
        %v860 = vld [vmem:[%s6 + $0x68] sm:$0xff]
        %v861 = vld [vmem:[%s6 + $0x70] sm:$0xff]
        %v862 = vld [vmem:[%s6 + $0x78] sm:$0xff]
        %863 = vmatprep.subr.mxu0 0.0
        %864 = vmatpush1.msra.mxu0 %v847
        %865 = vmatprep.subr.mxu0 0.0
        %866 = vmatpush1.msra.mxu0 %v848
        %867 = vmatprep.subr.mxu0 0.0
        %868 = vmatpush1.msra.mxu0 %v849
        %869 = vmatprep.subr.mxu0 0.0
        %870 = vmatpush1.msra.mxu0 %v850
        %871 = vmatprep.subr.mxu0 0.0
        %872 = vmatpush1.msra.mxu0 %v851
        %873 = vmatprep.subr.mxu0 0.0
        %874 = vmatpush1.msra.mxu0 %v852
        %875 = vmatprep.subr.mxu0 0.0
        %876 = vmatpush1.msra.mxu0 %v853
        %877 = vmatprep.subr.mxu0 0.0
        %878 = vmatpush1.msra.mxu0 %v854
        %879 = vmatprep.subr.mxu0 0.0
        %880 = vmatpush1.msra.mxu0 %v855
        %881 = vmatprep.subr.mxu0 0.0
        %882 = vmatpush1.msra.mxu0 %v856
        %883 = vmatprep.subr.mxu0 0.0
        %884 = vmatpush1.msra.mxu0 %v857
        %885 = vmatprep.subr.mxu0 0.0
        %886 = vmatpush1.msra.mxu0 %v858
        %887 = vmatprep.subr.mxu0 0.0
        %888 = vmatpush1.msra.mxu0 %v859
        %889 = vmatprep.subr.mxu0 0.0
        %890 = vmatpush1.msra.mxu0 %v860
        %891 = vmatprep.subr.mxu0 0.0
        %892 = vmatpush1.msra.mxu0 %v861
        %893 = vmatprep.subr.mxu0 0.0
        %894 = vmatpush1.msra.mxu0 %v862
        %895 = vmatprep.subr.mxu0 0.0
        %896 = vmatpush1.msra.mxu0 0.0
        %897 = vmatprep.subr.mxu0 0.0
        %898 = vmatpush1.msra.mxu0 0.0
        %899 = vmatprep.subr.mxu0 0.0
        %900 = vmatpush1.msra.mxu0 0.0
        %901 = vmatprep.subr.mxu0 0.0
        %902 = vmatpush1.msra.mxu0 0.0
        %903 = vmatprep.subr.mxu0 0.0
        %904 = vmatpush1.msra.mxu0 0.0
        %905 = vmatprep.subr.mxu0 0.0
        %906 = vmatpush1.msra.mxu0 0.0
        %907 = vmatprep.subr.mxu0 0.0
        %908 = vmatpush1.msra.mxu0 0.0
        %909 = vmatprep.subr.mxu0 0.0
        %910 = vmatpush1.msra.mxu0 0.0
        %911 = vmatprep.subr.mxu0 0.0
        %912 = vmatpush1.msra.mxu0 0.0
        %913 = vmatprep.subr.mxu0 0.0
        %914 = vmatpush1.msra.mxu0 0.0
        %915 = vmatprep.subr.mxu0 0.0
        %916 = vmatpush1.msra.mxu0 0.0
        %917 = vmatprep.subr.mxu0 0.0
        %918 = vmatpush1.msra.mxu0 0.0
        %919 = vmatprep.subr.mxu0 0.0
        %920 = vmatpush1.msra.mxu0 0.0
        %921 = vmatprep.subr.mxu0 0.0
        %922 = vmatpush1.msra.mxu0 0.0
        %923 = vmatprep.subr.mxu0 0.0
        %924 = vmatpush1.msra.mxu0 0.0
        %925 = vmatprep.subr.mxu0 0.0
        %926 = vmatpush1.msra.mxu0 0.0
        %927 = vmatprep.mubr.f32.mxu0 0.0
        %928 = vmatmul.mubr.f32.gmra.mrb[0].mxu0 %v842
        %v929 = vpop.f32.mrb[0].mxu0
        %v930 = vadd.f32 0.0, %v929
        %v931 = vpop.f32.mrb[0].mxu0
        %932 = vdwg.mxu0
        %v934 = vsel %vm821, %v829, 0
        %936 = vmatprep.subr.mxu0 0.0
        %937 = vmatpush1.msra.mxu0 %v843
        %938 = vmatprep.subr.mxu0 0.0
        %939 = vmatpush1.msra.mxu0 %v844
        %940 = vmatprep.subr.mxu0 0.0
        %941 = vmatpush1.msra.mxu0 %v845
        %942 = vmatprep.subr.mxu0 0.0
        %943 = vmatpush1.msra.mxu0 %v846
        %944 = vmatprep.subr.mxu0 0.0
        %945 = vmatpush1.msra.mxu0 0.0
        %946 = vmatprep.subr.mxu0 0.0
        %947 = vmatpush1.msra.mxu0 0.0
        %948 = vmatprep.subr.mxu0 0.0
        %949 = vmatpush1.msra.mxu0 0.0
        %950 = vmatprep.subr.mxu0 0.0
        %951 = vmatpush1.msra.mxu0 0.0
        %952 = vmatprep.subr.mxu0 0.0
        %953 = vmatpush1.msra.mxu0 0.0
        %954 = vmatprep.subr.mxu0 0.0
        %955 = vmatpush1.msra.mxu0 0.0
        %956 = vmatprep.subr.mxu0 0.0
        %957 = vmatpush1.msra.mxu0 0.0
        %958 = vmatprep.subr.mxu0 0.0
        %959 = vmatpush1.msra.mxu0 0.0
        %960 = vmatprep.subr.mxu0 0.0
        %961 = vmatpush1.msra.mxu0 0.0
        %962 = vmatprep.subr.mxu0 0.0
        %963 = vmatpush1.msra.mxu0 0.0
        %964 = vmatprep.subr.mxu0 0.0
        %965 = vmatpush1.msra.mxu0 0.0
        %966 = vmatprep.subr.mxu0 0.0
        %967 = vmatpush1.msra.mxu0 0.0
        %968 = vmatprep.subr.mxu0 0.0
        %969 = vmatpush1.msra.mxu0 0.0
        %970 = vmatprep.subr.mxu0 0.0
        %971 = vmatpush1.msra.mxu0 0.0
        %972 = vmatprep.subr.mxu0 0.0
        %973 = vmatpush1.msra.mxu0 0.0
        %974 = vmatprep.subr.mxu0 0.0
        %975 = vmatpush1.msra.mxu0 0.0
        %976 = vmatprep.subr.mxu0 0.0
        %977 = vmatpush1.msra.mxu0 0.0
        %978 = vmatprep.subr.mxu0 0.0
        %979 = vmatpush1.msra.mxu0 0.0
        %980 = vmatprep.subr.mxu0 0.0
        %981 = vmatpush1.msra.mxu0 0.0
        %982 = vmatprep.subr.mxu0 0.0
        %983 = vmatpush1.msra.mxu0 0.0
        %984 = vmatprep.subr.mxu0 0.0
        %985 = vmatpush1.msra.mxu0 0.0
        %986 = vmatprep.subr.mxu0 0.0
        %987 = vmatpush1.msra.mxu0 0.0
        %988 = vmatprep.subr.mxu0 0.0
        %989 = vmatpush1.msra.mxu0 0.0
        %990 = vmatprep.subr.mxu0 0.0
        %991 = vmatpush1.msra.mxu0 0.0
        %992 = vmatprep.subr.mxu0 0.0
        %993 = vmatpush1.msra.mxu0 0.0
        %994 = vmatprep.subr.mxu0 0.0
        %995 = vmatpush1.msra.mxu0 0.0
        %996 = vmatprep.subr.mxu0 0.0
        %997 = vmatpush1.msra.mxu0 0.0
        %998 = vmatprep.subr.mxu0 0.0
        %999 = vmatpush1.msra.mxu0 0.0
        %1000 = vmatprep.mubr.f32.mxu0 0.0
        %1001 = vmatmul.mubr.f32.gmra.mrb[0].mxu0 %v934
        %v1002 = vpop.f32.mrb[0].mxu0
        %v1003 = vadd.f32 %v930, %v1002
        %v1004 = vpop.f32.mrb[0].mxu0
        %1005 = vdwg.mxu0
        %v1006 = vld [vmem:[%s7] sm:$0x1]
        %v1007 = vadd.f32 %v1003, %v1006
        %vm1008 = vcmask 57344
        %1009 = vst.msk [vmem:[%s334] sm:$0x1] %vm1008, %v1007
        %s1010 = sand.u32 %s214, 1
        %s1011 = scalar_lea.sflag [#allocation4], %s1010
        %s1012 = sand.u32 %s214, 1
        %s1013 = scalar_lea.vmem [#allocation5], %s1012
        // Predicated region
        $region57: #{tpu_custom_call.1} parent=51 // pred_check
          %p1014 = pneg %p224
        $region58: #{tpu_custom_call.1} parent=51 // pred_check_branch
          %1016 = sbr.rel (%p1014) target = $region60
        $region59: #{tpu_custom_call.1} parent=51 // pred_region
          %s1018 = ssub.s32 16, 16
          %1019 = vsyncadd %s1011, %s1018
          %s1020 = smul.addr %s23, 16
          %s1021 = scalar_lea.hbm %s8, %s1020
          %s1023 = sshll.u32 %s1013, 4
          %s1024 = int_to_ptr.vmem [resolvable:$true] %s1023
          %1026 = dma.vmem_to_hbm [thread:$0]  %s1024, 16, %s1021, %s1011
        $region60: #{tpu_custom_call.1} parent=51 // pred_fallthru
          _
      $region52: #{tpu_custom_call.1} parent=5 // pred_fallthru
        _
      %p1027 = scmp.le.s32.totalorder 2, %s18
      // Predicated region
      $region61: #{tpu_custom_call.1} parent=5 // pred_check
        %p1028 = pneg %p1027
      $region62: #{tpu_custom_call.1} parent=5 // pred_check_branch
        %1030 = sbr.rel (%p1028) target = $region64
      $region63: #{tpu_custom_call.1} parent=5 // pred_region
        %s1031 = ssub.s32 %s18, 2
        // Predicated region
        $region65: #{tpu_custom_call.1} parent=63 // pred_check
          %p1032 = pneg %p230
        $region66: #{tpu_custom_call.1} parent=63 // pred_check_branch
          %1034 = sbr.rel (%p1032) target = $region68
        $region67: #{tpu_custom_call.1} parent=63 // pred_region
          %s1035 = sand.u32 %s215, 1
          %s1036 = scalar_lea.sflag [#allocation4], %s1035
          %s1037 = sand.u32 %s215, 1
          %s1038 = scalar_lea.vmem [#allocation5], %s1037
          %1039 = dma.done %s1036, 16
        $region68: #{tpu_custom_call.1} parent=63 // pred_fallthru
          _
      $region64: #{tpu_custom_call.1} parent=5 // pred_fallthru
        _
    $region6: #{tpu_custom_call.1} parent=1 // loop_footer
      %s22 = sadd.s32 1, %s18
    $region7: #{tpu_custom_call.1} parent=1 // loop_footer_branch
      %17 = sbr.rel target = $region3
    $region8: #{tpu_custom_call.1} parent=1 // loop_exit
      _
    %1040 = vsyncpa [#allocation3], 1
    %s1041 = scalar_lea.sflag [#allocation3], 1
    %1042 = vsyncpa %s1041, 1
    %1043 = vsyncpa [#allocation4], 1
    %s1044 = scalar_lea.sflag [#allocation4], 1
    %1045 = vsyncpa %s1044, 1

</llo_original>
